<compile_context>
chip_gen: v6e
topology: v6e:2x2x1
jax: 0.10.0
libtpu: 0.0.40
codegen_flags: <defaults>
</compile_context>

<pallas_src>
import functools

import jax
import jax.numpy as jnp
from jax.experimental import pallas as pl
from jax.experimental.pallas import tpu as pltpu

LN_EPS = 1e-5


def _adaln_kernel(x_ref, emb_ref, gamma_ref, beta_ref,
                  ws_ref, wsh_ref, bs1_ref, bsh_ref, o_ref, *, inv_in_dim):
    # ---- load small resident params once, in f32 (no repeated broadcasts/casts) ----
    gamma = gamma_ref[...].astype(jnp.float32)        # (1, in_dim)
    beta = beta_ref[...].astype(jnp.float32)          # (1, in_dim)
    b_scale1 = bs1_ref[...].astype(jnp.float32)       # (1, in_dim), already includes "+1"
    b_shift = bsh_ref[...].astype(jnp.float32)        # (1, in_dim)

    # ---- LayerNorm over the last dim (lanes); statistics in f32 ----
    x = x_ref[...].astype(jnp.float32)                # (tb, in_dim)
    mean = jnp.sum(x, axis=-1, keepdims=True) * inv_in_dim
    centered = x - mean
    var = jnp.sum(centered * centered, axis=-1, keepdims=True) * inv_in_dim
    xn = centered * jax.lax.rsqrt(var + LN_EPS)       # rsqrt -> EUP slot
    xn = xn * gamma + beta

    # ---- scale/shift = emb @ W_{scale,shift} + b  (two lane-dense MXU matmuls,
    #      activation-dtype operands, f32 accumulation; no lane-dim slicing) ----
    emb = emb_ref[...]                                # (tb, embed_dim), native dtype
    scale = jnp.dot(emb, ws_ref[...], preferred_element_type=jnp.float32) + b_scale1
    shift = jnp.dot(emb, wsh_ref[...], preferred_element_type=jnp.float32) + b_shift

    # ---- adaptive modulation ("+1" folded into b_scale1), single store ----
    o_ref[...] = (xn * scale + shift).astype(o_ref.dtype)


def adaln_forward(x, emb, gamma, beta, w, b, *, block_b_max=512):
    """x: (B, in_dim), emb: (B, embed_dim), gamma/beta: (in_dim,),
    w: (embed_dim, 2*in_dim)  (== PyTorch weight.T), b: (2*in_dim,)."""
    B, in_dim = x.shape
    _, embed_dim = emb.shape
    out_dtype = x.dtype
    act_dtype = emb.dtype
    act_isz = jnp.dtype(act_dtype).itemsize
    out_isz = jnp.dtype(out_dtype).itemsize
    x_isz = jnp.dtype(x.dtype).itemsize

    # --- weights in the activation dtype => bf16 x bf16 MXU matmul w/ f32 acc for
    #     bf16 models; split the Linear into lane-dense scale/shift halves ---
    w = w.astype(act_dtype)
    w_scale = w[:, :in_dim]
    w_shift = w[:, in_dim:]
    # fold the "+1" of (1 + scale) into the scale bias (kernel computes xn*scale+shift)
    b_scale1 = (b[:in_dim].astype(jnp.float32) + 1.0).reshape(1, in_dim)
    b_shift = b[in_dim:].astype(jnp.float32).reshape(1, in_dim)
    gamma2 = gamma.astype(jnp.float32).reshape(1, in_dim)
    beta2 = beta.astype(jnp.float32).reshape(1, in_dim)

    # --- VMEM budget: physical capacity minus headroom, capped; raise the scoped
    #     default (16/32 MiB) so the intended tile is actually granted ---
    try:
        vmem_cap = int(pltpu.get_tpu_info().vmem_capacity_bytes)
    except Exception:
        vmem_cap = 64 * 1024 * 1024  # conservative (v7x-sized) fallback
    vmem_limit = max(32 * 1024 * 1024,
                     min(vmem_cap - 16 * 1024 * 1024, 100 * 1024 * 1024))

    # --- pick the batch tile ---
    # packed-sublane multiple: 8 rows for 4-byte, 16 for 2-byte, 32 for 1-byte dtypes
    row_mult = {1: 32, 2: 16}.get(act_isz, 8)
    # resident params (single-buffered target; budget x2 in case of fallback)
    resident = 2 * embed_dim * in_dim * act_isz + 4 * in_dim * 4
    # streaming (double-buffered) tiles per row + ~6 f32 temporaries per row
    per_row = (2 * (in_dim * x_isz + embed_dim * act_isz + in_dim * out_isz)
               + 6 * in_dim * 4)
    budget_rows = max(row_mult, int(0.8 * (vmem_limit - 2 * resident)) // per_row)
    # TODO(synk): for very large embed_dim*in_dim (weights > VMEM budget) add a
    # second grid axis over in_dim to tile the weight halves.

    block_b = min(block_b_max, B, max(pl.cdiv(B, 4), row_mult), budget_rows)
    block_b = max(row_mult, pl.cdiv(block_b, row_mult) * row_mult)

    grid = (pl.cdiv(B, block_b),)   # ragged last block is masked; no pad / slice

    kernel = functools.partial(_adaln_kernel, inv_in_dim=1.0 / in_dim)

    cost = pl.CostEstimate(
        flops=2 * B * embed_dim * 2 * in_dim + 10 * B * in_dim,
        transcendentals=B,  # one rsqrt per row
        bytes_accessed=(x.size * x_isz + emb.size * act_isz + B * in_dim * out_isz
                        + 2 * embed_dim * in_dim * act_isz + 4 * in_dim * 4),
    )

    def _tile_map(i):
        return (i, 0)

    def _const_map(i):
        return (0, 0)

    def _build_in_specs(resident_buffers):
        if resident_buffers is None:
            res_kw = {}
        else:
            # constant index_map => single-buffer the resident operands (saves VMEM)
            res_kw = {"pipeline_mode": pl.Buffered(resident_buffers)}
        return [
            pl.BlockSpec((block_b, in_dim), _tile_map),                  # x tile
            pl.BlockSpec((block_b, embed_dim), _tile_map),               # emb tile
            pl.BlockSpec((1, in_dim), _const_map, **res_kw),             # gamma
            pl.BlockSpec((1, in_dim), _const_map, **res_kw),             # beta
            pl.BlockSpec((embed_dim, in_dim), _const_map, **res_kw),     # W_scale
            pl.BlockSpec((embed_dim, in_dim), _const_map, **res_kw),     # W_shift
            pl.BlockSpec((1, in_dim), _const_map, **res_kw),             # b_scale + 1
            pl.BlockSpec((1, in_dim), _const_map, **res_kw),             # b_shift
        ]

    def _run(resident_buffers):
        return pl.pallas_call(
            kernel,
            out_shape=jax.ShapeDtypeStruct((B, in_dim), out_dtype),
            grid_spec=pltpu.PrefetchScalarGridSpec(
                num_scalar_prefetch=0,
                grid=grid,
                in_specs=_build_in_specs(resident_buffers),
                out_specs=pl.BlockSpec((block_b, in_dim), _tile_map),
            ),
            compiler_params=pltpu.CompilerParams(
                dimension_semantics=("parallel",),
                vmem_limit_bytes=vmem_limit),
            cost_estimate=cost,
        )(x, emb, gamma2, beta2, w_scale, w_shift, b_scale1, b_shift)

    try:
        out = _run(1)
        jax.block_until_ready(out)
        return out
    except Exception:
        # Fallback for Pallas versions without BlockSpec pipeline_mode support:
        # identical math, default double-buffered resident operands.
        return _run(None)


def adaln_reference(x, emb, gamma, beta, w, b):
    xf = x.astype(jnp.float32)
    mean = jnp.mean(xf, axis=-1, keepdims=True)
    var = jnp.mean((xf - mean) ** 2, axis=-1, keepdims=True)
    xn = (xf - mean) / jnp.sqrt(var + LN_EPS)
    xn = xn * gamma + beta
    ss = emb.astype(jnp.float32) @ w.astype(jnp.float32) + b
    in_dim = x.shape[-1]
    scale, shift = ss[:, :in_dim], ss[:, in_dim:]
    return (xn * (1 + scale) + shift).astype(x.dtype)


if __name__ == "__main__":
    # Small demo shapes; B deliberately NOT a multiple of the batch tile so the
    # ragged-last-block (masked write) path is exercised and verified.
    B, in_dim, embed_dim = 20, 32, 16

    key = jax.random.PRNGKey(0)
    kx, ke, kw, kb = jax.random.split(key, 4)

    x = jax.random.normal(kx, (B, in_dim), dtype=jnp.float32)
    emb = jax.random.normal(ke, (B, embed_dim), dtype=jnp.float32)

    # LayerNorm affine params (PyTorch default init: weight=1, bias=0)
    gamma = jnp.ones((in_dim,), dtype=jnp.float32)
    beta = jnp.zeros((in_dim,), dtype=jnp.float32)

    # Linear(embed_dim -> 2*in_dim). Stored as (embed_dim, 2*in_dim) == weight.T.
    # (Module zero-inits these; use deterministic randoms to exercise the kernel.)
    w = 0.05 * jax.random.normal(kw, (embed_dim, 2 * in_dim), dtype=jnp.float32)
    b = 0.05 * jax.random.normal(kb, (2 * in_dim,), dtype=jnp.float32)

    out = adaln_forward(x, emb, gamma, beta, w, b)
    out = jax.block_until_ready(out)

    ref = adaln_reference(x, emb, gamma, beta, w, b)
    assert out.shape == (B, in_dim)
    assert jnp.allclose(out, ref, atol=1e-5, rtol=1e-5), "mismatch vs reference"

    print("KERNEL_OK")
</pallas_src>

<mosaic_0001>
module attributes {stable_mosaic.version = 11 : i64} {
  func.func @_adaln_kernel(%arg0: i32, %arg1: memref<8x32xf32, #tpu.memory_space<vmem>>, %arg2: memref<8x16xf32, #tpu.memory_space<vmem>>, %arg3: memref<1x32xf32, #tpu.memory_space<vmem>>, %arg4: memref<1x32xf32, #tpu.memory_space<vmem>>, %arg5: memref<16x32xf32, #tpu.memory_space<vmem>>, %arg6: memref<16x32xf32, #tpu.memory_space<vmem>>, %arg7: memref<1x32xf32, #tpu.memory_space<vmem>>, %arg8: memref<1x32xf32, #tpu.memory_space<vmem>>, %arg9: memref<8x32xf32, #tpu.memory_space<vmem>>) attributes {dimension_semantics = [#tpu.dimension_semantics<parallel>], iteration_bounds = array<i64: 3>, scalar_prefetch = 0 : i64, scratch_operands = 0 : i64, tpu.core_type = #tpu.core_type<tc>, window_params = [{transform_indices = @transform_0, window_bounds = array<i64: 8, 32>}, {transform_indices = @transform_1, window_bounds = array<i64: 8, 16>}, {pipeline_mode = #tpu.pipeline_mode<synchronous>, transform_indices = @transform_2, window_bounds = array<i64: 1, 32>}, {pipeline_mode = #tpu.pipeline_mode<synchronous>, transform_indices = @transform_3, window_bounds = array<i64: 1, 32>}, {pipeline_mode = #tpu.pipeline_mode<synchronous>, transform_indices = @transform_4, window_bounds = array<i64: 16, 32>}, {pipeline_mode = #tpu.pipeline_mode<synchronous>, transform_indices = @transform_5, window_bounds = array<i64: 16, 32>}, {pipeline_mode = #tpu.pipeline_mode<synchronous>, transform_indices = @transform_6, window_bounds = array<i64: 1, 32>}, {pipeline_mode = #tpu.pipeline_mode<synchronous>, transform_indices = @transform_7, window_bounds = array<i64: 1, 32>}, {transform_indices = @transform_8, window_bounds = array<i64: 8, 32>}]} {
    %c0 = arith.constant 0 : index
    %c0_0 = arith.constant 0 : index
    %0 = vector.load %arg3[%c0, %c0_0] : memref<1x32xf32, #tpu.memory_space<vmem>>, vector<1x32xf32>
    %c0_1 = arith.constant 0 : index
    %c0_2 = arith.constant 0 : index
    %1 = vector.load %arg4[%c0_1, %c0_2] : memref<1x32xf32, #tpu.memory_space<vmem>>, vector<1x32xf32>
    %c0_3 = arith.constant 0 : index
    %c0_4 = arith.constant 0 : index
    %2 = vector.load %arg7[%c0_3, %c0_4] : memref<1x32xf32, #tpu.memory_space<vmem>>, vector<1x32xf32>
    %c0_5 = arith.constant 0 : index
    %c0_6 = arith.constant 0 : index
    %3 = vector.load %arg8[%c0_5, %c0_6] : memref<1x32xf32, #tpu.memory_space<vmem>>, vector<1x32xf32>
    %c0_7 = arith.constant 0 : index
    %c0_8 = arith.constant 0 : index
    %4 = vector.load %arg1[%c0_7, %c0_8] : memref<8x32xf32, #tpu.memory_space<vmem>>, vector<8x32xf32>
    %cst = arith.constant dense<0.000000e+00> : vector<8xf32>
    %5 = vector.multi_reduction <add>, %4, %cst [1] : vector<8x32xf32> to vector<8xf32>
    %6 = vector.shape_cast %5 : vector<8xf32> to vector<8x1xf32>
    %cst_9 = arith.constant 3.125000e-02 : f32
    %7 = vector.broadcast %cst_9 : f32 to vector<8x1xf32>
    %8 = arith.mulf %6, %7 : vector<8x1xf32>
    %9 = vector.broadcast %8 : vector<8x1xf32> to vector<8x32xf32>
    %10 = arith.subf %4, %9 : vector<8x32xf32>
    %11 = arith.mulf %10, %10 : vector<8x32xf32>
    %cst_10 = arith.constant dense<0.000000e+00> : vector<8xf32>
    %12 = vector.multi_reduction <add>, %11, %cst_10 [1] : vector<8x32xf32> to vector<8xf32>
    %13 = vector.shape_cast %12 : vector<8xf32> to vector<8x1xf32>
    %cst_11 = arith.constant 3.125000e-02 : f32
    %14 = vector.broadcast %cst_11 : f32 to vector<8x1xf32>
    %15 = arith.mulf %13, %14 : vector<8x1xf32>
    %cst_12 = arith.constant 9.99999974E-6 : f32
    %16 = vector.broadcast %cst_12 : f32 to vector<8x1xf32>
    %17 = arith.addf %15, %16 : vector<8x1xf32>
    %18 = math.rsqrt %17 : vector<8x1xf32>
    %19 = vector.broadcast %18 : vector<8x1xf32> to vector<8x32xf32>
    %20 = arith.mulf %10, %19 : vector<8x32xf32>
    %21 = vector.broadcast %0 : vector<1x32xf32> to vector<8x32xf32>
    %22 = arith.mulf %20, %21 : vector<8x32xf32>
    %23 = vector.broadcast %1 : vector<1x32xf32> to vector<8x32xf32>
    %24 = arith.addf %22, %23 : vector<8x32xf32>
    %c0_13 = arith.constant 0 : index
    %c0_14 = arith.constant 0 : index
    %25 = vector.load %arg2[%c0_13, %c0_14] : memref<8x16xf32, #tpu.memory_space<vmem>>, vector<8x16xf32>
    %c0_15 = arith.constant 0 : index
    %c0_16 = arith.constant 0 : index
    %26 = vector.load %arg5[%c0_15, %c0_16] : memref<16x32xf32, #tpu.memory_space<vmem>>, vector<16x32xf32>
    %cst_17 = arith.constant dense<0.000000e+00> : vector<8x32xf32>
    %27 = tpu.matmul %25, %26, %cst_17 {dimension_numbers = #tpu.dot_dimension_numbers<[1], [0], [0], [1], [0, 0, 1, 1], [], []>} : vector<8x16xf32>, vector<16x32xf32>, vector<8x32xf32> -> vector<8x32xf32>
    %28 = vector.broadcast %2 : vector<1x32xf32> to vector<8x32xf32>
    %29 = arith.addf %27, %28 : vector<8x32xf32>
    %c0_18 = arith.constant 0 : index
    %c0_19 = arith.constant 0 : index
    %30 = vector.load %arg6[%c0_18, %c0_19] : memref<16x32xf32, #tpu.memory_space<vmem>>, vector<16x32xf32>
    %cst_20 = arith.constant dense<0.000000e+00> : vector<8x32xf32>
    %31 = tpu.matmul %25, %30, %cst_20 {dimension_numbers = #tpu.dot_dimension_numbers<[1], [0], [0], [1], [0, 0, 1, 1], [], []>} : vector<8x16xf32>, vector<16x32xf32>, vector<8x32xf32> -> vector<8x32xf32>
    %32 = vector.broadcast %3 : vector<1x32xf32> to vector<8x32xf32>
    %33 = arith.addf %31, %32 : vector<8x32xf32>
    %34 = arith.mulf %24, %29 : vector<8x32xf32>
    %35 = arith.addf %34, %33 : vector<8x32xf32>
    %c0_21 = arith.constant 0 : index
    %c0_22 = arith.constant 0 : index
    %36 = vector.load %arg9[%c0_21, %c0_22] : memref<8x32xf32, #tpu.memory_space<vmem>>, vector<8x32xf32>
    tpu.vector_store %arg9[%c0_21, %c0_22], %35 {strides = array<i32>} : memref<8x32xf32, #tpu.memory_space<vmem>>, vector<8x32xf32>,
    return
  }
  func.func @transform_0(%arg0: i32) -> (i32, i32) {
    %c0_i32 = arith.constant 0 : i32
    %c0_i32_0 = arith.constant 0 : i32
    return %arg0, %c0_i32 : i32, i32
  }
  func.func @transform_1(%arg0: i32) -> (i32, i32) {
    %c0_i32 = arith.constant 0 : i32
    %c0_i32_0 = arith.constant 0 : i32
    return %arg0, %c0_i32 : i32, i32
  }
  func.func @transform_2(%arg0: i32) -> (i32, i32) {
    %c0_i32 = arith.constant 0 : i32
    %c0_i32_0 = arith.constant 0 : i32
    %c0_i32_1 = arith.constant 0 : i32
    return %c0_i32, %c0_i32_0 : i32, i32
  }
  func.func @transform_3(%arg0: i32) -> (i32, i32) {
    %c0_i32 = arith.constant 0 : i32
    %c0_i32_0 = arith.constant 0 : i32
    %c0_i32_1 = arith.constant 0 : i32
    return %c0_i32, %c0_i32_0 : i32, i32
  }
  func.func @transform_4(%arg0: i32) -> (i32, i32) {
    %c0_i32 = arith.constant 0 : i32
    %c0_i32_0 = arith.constant 0 : i32
    %c0_i32_1 = arith.constant 0 : i32
    return %c0_i32, %c0_i32_0 : i32, i32
  }
  func.func @transform_5(%arg0: i32) -> (i32, i32) {
    %c0_i32 = arith.constant 0 : i32
    %c0_i32_0 = arith.constant 0 : i32
    %c0_i32_1 = arith.constant 0 : i32
    return %c0_i32, %c0_i32_0 : i32, i32
  }
  func.func @transform_6(%arg0: i32) -> (i32, i32) {
    %c0_i32 = arith.constant 0 : i32
    %c0_i32_0 = arith.constant 0 : i32
    %c0_i32_1 = arith.constant 0 : i32
    return %c0_i32, %c0_i32_0 : i32, i32
  }
  func.func @transform_7(%arg0: i32) -> (i32, i32) {
    %c0_i32 = arith.constant 0 : i32
    %c0_i32_0 = arith.constant 0 : i32
    %c0_i32_1 = arith.constant 0 : i32
    return %c0_i32, %c0_i32_0 : i32, i32
  }
  func.func @transform_8(%arg0: i32) -> (i32, i32) {
    %c0_i32 = arith.constant 0 : i32
    %c0_i32_0 = arith.constant 0 : i32
    return %arg0, %c0_i32 : i32, i32
  }
}

module attributes {stable_mosaic.version = 11 : i64} {
  func.func @_adaln_kernel(%arg0: i32, %arg1: memref<8x32xf32, #tpu.memory_space<vmem>>, %arg2: memref<8x16xf32, #tpu.memory_space<vmem>>, %arg3: memref<1x32xf32, #tpu.memory_space<vmem>>, %arg4: memref<1x32xf32, #tpu.memory_space<vmem>>, %arg5: memref<16x32xf32, #tpu.memory_space<vmem>>, %arg6: memref<16x32xf32, #tpu.memory_space<vmem>>, %arg7: memref<1x32xf32, #tpu.memory_space<vmem>>, %arg8: memref<1x32xf32, #tpu.memory_space<vmem>>, %arg9: memref<8x32xf32, #tpu.memory_space<vmem>>) attributes {dimension_semantics = [#tpu.dimension_semantics<parallel>], iteration_bounds = array<i64: 3>, scalar_prefetch = 0 : i64, scratch_operands = 0 : i64, tpu.core_type = #tpu.core_type<tc>, window_params = [{transform_indices = @transform_0, window_bounds = array<i64: 8, 32>}, {transform_indices = @transform_1, window_bounds = array<i64: 8, 16>}, {pipeline_mode = #tpu.pipeline_mode<synchronous>, transform_indices = @transform_2, window_bounds = array<i64: 1, 32>}, {pipeline_mode = #tpu.pipeline_mode<synchronous>, transform_indices = @transform_3, window_bounds = array<i64: 1, 32>}, {pipeline_mode = #tpu.pipeline_mode<synchronous>, transform_indices = @transform_4, window_bounds = array<i64: 16, 32>}, {pipeline_mode = #tpu.pipeline_mode<synchronous>, transform_indices = @transform_5, window_bounds = array<i64: 16, 32>}, {pipeline_mode = #tpu.pipeline_mode<synchronous>, transform_indices = @transform_6, window_bounds = array<i64: 1, 32>}, {pipeline_mode = #tpu.pipeline_mode<synchronous>, transform_indices = @transform_7, window_bounds = array<i64: 1, 32>}, {transform_indices = @transform_8, window_bounds = array<i64: 8, 32>}]} {
    %c0 = arith.constant 0 : index
    %c0_0 = arith.constant 0 : index
    %0 = vector.load %arg3[%c0, %c0_0] : memref<1x32xf32, #tpu.memory_space<vmem>>, vector<1x32xf32>
    %c0_1 = arith.constant 0 : index
    %c0_2 = arith.constant 0 : index
    %1 = vector.load %arg4[%c0_1, %c0_2] : memref<1x32xf32, #tpu.memory_space<vmem>>, vector<1x32xf32>
    %c0_3 = arith.constant 0 : index
    %c0_4 = arith.constant 0 : index
    %2 = vector.load %arg7[%c0_3, %c0_4] : memref<1x32xf32, #tpu.memory_space<vmem>>, vector<1x32xf32>
    %c0_5 = arith.constant 0 : index
    %c0_6 = arith.constant 0 : index
    %3 = vector.load %arg8[%c0_5, %c0_6] : memref<1x32xf32, #tpu.memory_space<vmem>>, vector<1x32xf32>
    %c0_7 = arith.constant 0 : index
    %c0_8 = arith.constant 0 : index
    %4 = vector.load %arg1[%c0_7, %c0_8] : memref<8x32xf32, #tpu.memory_space<vmem>>, vector<8x32xf32>
    %cst = arith.constant dense<0.000000e+00> : vector<8xf32>
    %5 = vector.multi_reduction <add>, %4, %cst [1] : vector<8x32xf32> to vector<8xf32>
    %6 = vector.shape_cast %5 : vector<8xf32> to vector<8x1xf32>
    %cst_9 = arith.constant 3.125000e-02 : f32
    %7 = vector.broadcast %cst_9 : f32 to vector<8x1xf32>
    %8 = arith.mulf %6, %7 : vector<8x1xf32>
    %9 = vector.broadcast %8 : vector<8x1xf32> to vector<8x32xf32>
    %10 = arith.subf %4, %9 : vector<8x32xf32>
    %11 = arith.mulf %10, %10 : vector<8x32xf32>
    %cst_10 = arith.constant dense<0.000000e+00> : vector<8xf32>
    %12 = vector.multi_reduction <add>, %11, %cst_10 [1] : vector<8x32xf32> to vector<8xf32>
    %13 = vector.shape_cast %12 : vector<8xf32> to vector<8x1xf32>
    %cst_11 = arith.constant 3.125000e-02 : f32
    %14 = vector.broadcast %cst_11 : f32 to vector<8x1xf32>
    %15 = arith.mulf %13, %14 : vector<8x1xf32>
    %cst_12 = arith.constant 9.99999974E-6 : f32
    %16 = vector.broadcast %cst_12 : f32 to vector<8x1xf32>
    %17 = arith.addf %15, %16 : vector<8x1xf32>
    %18 = math.rsqrt %17 : vector<8x1xf32>
    %19 = vector.broadcast %18 : vector<8x1xf32> to vector<8x32xf32>
    %20 = arith.mulf %10, %19 : vector<8x32xf32>
    %21 = vector.broadcast %0 : vector<1x32xf32> to vector<8x32xf32>
    %22 = arith.mulf %20, %21 : vector<8x32xf32>
    %23 = vector.broadcast %1 : vector<1x32xf32> to vector<8x32xf32>
    %24 = arith.addf %22, %23 : vector<8x32xf32>
    %c0_13 = arith.constant 0 : index
    %c0_14 = arith.constant 0 : index
    %25 = vector.load %arg2[%c0_13, %c0_14] : memref<8x16xf32, #tpu.memory_space<vmem>>, vector<8x16xf32>
    %c0_15 = arith.constant 0 : index
    %c0_16 = arith.constant 0 : index
    %26 = vector.load %arg5[%c0_15, %c0_16] : memref<16x32xf32, #tpu.memory_space<vmem>>, vector<16x32xf32>
    %cst_17 = arith.constant dense<0.000000e+00> : vector<8x32xf32>
    %27 = tpu.matmul %25, %26, %cst_17 {dimension_numbers = #tpu.dot_dimension_numbers<[1], [0], [0], [1], [0, 0, 1, 1], [], []>} : vector<8x16xf32>, vector<16x32xf32>, vector<8x32xf32> -> vector<8x32xf32>
    %28 = vector.broadcast %2 : vector<1x32xf32> to vector<8x32xf32>
    %29 = arith.addf %27, %28 : vector<8x32xf32>
    %c0_18 = arith.constant 0 : index
    %c0_19 = arith.constant 0 : index
    %30 = vector.load %arg6[%c0_18, %c0_19] : memref<16x32xf32, #tpu.memory_space<vmem>>, vector<16x32xf32>
    %cst_20 = arith.constant dense<0.000000e+00> : vector<8x32xf32>
    %31 = tpu.matmul %25, %30, %cst_20 {dimension_numbers = #tpu.dot_dimension_numbers<[1], [0], [0], [1], [0, 0, 1, 1], [], []>} : vector<8x16xf32>, vector<16x32xf32>, vector<8x32xf32> -> vector<8x32xf32>
    %32 = vector.broadcast %3 : vector<1x32xf32> to vector<8x32xf32>
    %33 = arith.addf %31, %32 : vector<8x32xf32>
    %34 = arith.mulf %24, %29 : vector<8x32xf32>
    %35 = arith.addf %34, %33 : vector<8x32xf32>
    %c0_21 = arith.constant 0 : index
    %c0_22 = arith.constant 0 : index
    %36 = vector.load %arg9[%c0_21, %c0_22] : memref<8x32xf32, #tpu.memory_space<vmem>>, vector<8x32xf32>
    tpu.vector_store %arg9[%c0_21, %c0_22], %35 {strides = array<i32>} : memref<8x32xf32, #tpu.memory_space<vmem>>, vector<8x32xf32>,
    return
  }
  func.func @transform_0(%arg0: i32) -> (i32, i32) {
    %c0_i32 = arith.constant 0 : i32
    %c0_i32_0 = arith.constant 0 : i32
    return %arg0, %c0_i32 : i32, i32
  }
  func.func @transform_1(%arg0: i32) -> (i32, i32) {
    %c0_i32 = arith.constant 0 : i32
    %c0_i32_0 = arith.constant 0 : i32
    return %arg0, %c0_i32 : i32, i32
  }
  func.func @transform_2(%arg0: i32) -> (i32, i32) {
    %c0_i32 = arith.constant 0 : i32
    %c0_i32_0 = arith.constant 0 : i32
    %c0_i32_1 = arith.constant 0 : i32
    return %c0_i32, %c0_i32_0 : i32, i32
  }
  func.func @transform_3(%arg0: i32) -> (i32, i32) {
    %c0_i32 = arith.constant 0 : i32
    %c0_i32_0 = arith.constant 0 : i32
    %c0_i32_1 = arith.constant 0 : i32
    return %c0_i32, %c0_i32_0 : i32, i32
  }
  func.func @transform_4(%arg0: i32) -> (i32, i32) {
    %c0_i32 = arith.constant 0 : i32
    %c0_i32_0 = arith.constant 0 : i32
    %c0_i32_1 = arith.constant 0 : i32
    return %c0_i32, %c0_i32_0 : i32, i32
  }
  func.func @transform_5(%arg0: i32) -> (i32, i32) {
    %c0_i32 = arith.constant 0 : i32
    %c0_i32_0 = arith.constant 0 : i32
    %c0_i32_1 = arith.constant 0 : i32
    return %c0_i32, %c0_i32_0 : i32, i32
  }
  func.func @transform_6(%arg0: i32) -> (i32, i32) {
    %c0_i32 = arith.constant 0 : i32
    %c0_i32_0 = arith.constant 0 : i32
    %c0_i32_1 = arith.constant 0 : i32
    return %c0_i32, %c0_i32_0 : i32, i32
  }
  func.func @transform_7(%arg0: i32) -> (i32, i32) {
    %c0_i32 = arith.constant 0 : i32
    %c0_i32_0 = arith.constant 0 : i32
    %c0_i32_1 = arith.constant 0 : i32
    return %c0_i32, %c0_i32_0 : i32, i32
  }
  func.func @transform_8(%arg0: i32) -> (i32, i32) {
    %c0_i32 = arith.constant 0 : i32
    %c0_i32_0 = arith.constant 0 : i32
    return %arg0, %c0_i32 : i32, i32
  }
}

</mosaic_0001>

<llo_original>
// kernel: tpu_custom_call.1
$region0: #{tpu_custom_call.1}
  #allocation0 [shape = 'u32[]', space=smem, size = 0x4, offset = 0x4, fixed_abs, tag = 'smem constant byte address 0x4 - core index']
  #allocation1 [shape = 'u32[144,128]{1,0:T(1,128)}', space=vmem, size = 0x12000, scoped, tag = 'internal scratch']
  %s0 = inlined_call_operand.vmem [shape: f32[20,32], index: 0, kind: input, shape index: {}]
  %s1 = inlined_call_operand.vmem [shape: f32[20,16], index: 1, kind: input, shape index: {}]
  %s2 = inlined_call_operand.vmem [shape: f32[1,32], index: 2, kind: input, shape index: {}]
  %s3 = inlined_call_operand.vmem [shape: f32[1,32], index: 3, kind: input, shape index: {}]
  %s4 = inlined_call_operand.vmem [shape: f32[16,32], index: 4, kind: input, shape index: {}]
  %s5 = inlined_call_operand.hbm [shape: f32[16,32], index: 5, kind: input, shape index: {}]
  %s6 = inlined_call_operand.vmem [shape: f32[1,32], index: 6, kind: input, shape index: {}]
  %s7 = inlined_call_operand.vmem [shape: f32[1,32], index: 7, kind: input, shape index: {}]
  %s8 = inlined_call_operand.hbm [shape: f32[20,32], index: 8, kind: output, shape index: {}]
  %s9 = sld [smem:[#allocation0]]
  $region69: #{tpu_custom_call.1} parent=0
    _
  %s11 = ssub.s32 1, %s9
  %s12 = scalar_select 0, %s11, %s9
  $region1: #{tpu_custom_call.1} parent=0
    #allocation2 [shape = 'u8[8192]{0}', space=vmem, size = 0x2000, scoped, tag = 'input window, operand 5, single buffered']
    #allocation3 [shape = 's32[2]{0}', space=sflag, size = 0x8, scoped, tag = 'scoped memory for tpu_custom_call.1']
    #allocation4 [shape = 's32[2]{0}', space=sflag, size = 0x8, scoped, tag = 'scoped memory for tpu_custom_call.1']
    #allocation5 [shape = 'u8[8192]{0}', space=vmem, size = 0x2000, scoped, tag = 'output window, operand 0']
    %13 = vsyncpa [#allocation3], 0
    %14 = vsyncpa [#allocation4], 0
    %s15 = scalar_lea.sflag [#allocation4], 1
    %16 = vsyncpa %s15, 0
    loop: start=0, step=1, limit=5
    $region2: #{tpu_custom_call.1} parent=1 // loop_pre_header
      _
    $region3: #{tpu_custom_call.1} parent=1 // loop_header
      %s18 = sphi 0, %s22
      %p19 = scmp.ge.s32.totalorder %s18, 5
      %s28 = sphi 0, %s30
      %s31 = sphi 0, %s28
      %s32 = sphi 0, %s31
      %s48 = sphi 0, %s32
      %s54 = sphi 0, %s56
      %s57 = sphi 0, %s54
      %s58 = sphi 0, %s57
      %s74 = sphi 0, %s58
      %s78 = sphi 0, %s78
      %s80 = sphi 0, %s78
      %s81 = sphi 0, %s80
      %s95 = sphi 0, %s81
      %s99 = sphi 0, %s99
      %s101 = sphi 0, %s99
      %s102 = sphi 0, %s101
      %s116 = sphi 0, %s102
      %s120 = sphi 0, %s120
      %s122 = sphi 0, %s120
      %s123 = sphi 0, %s122
      %s137 = sphi 0, %s123
      %s141 = sphi 0, %s141
      %s143 = sphi 0, %s141
      %s144 = sphi 0, %s143
      %s158 = sphi 0, %s144
      %s162 = sphi 0, %s162
      %s164 = sphi 0, %s162
      %s165 = sphi 0, %s164
      %s179 = sphi 0, %s165
      %s183 = sphi 0, %s183
      %s185 = sphi 0, %s183
      %s186 = sphi 0, %s185
      %s200 = sphi 0, %s186
      %s206 = sphi 0, %s208
      %s209 = sphi 0, %s206
      %s210 = sphi 0, %s209
      %s226 = sphi 0, %s210
    $region4: #{tpu_custom_call.1} parent=1 // loop_header_branch
      %21 = sbr.rel (%p19) target = $region8
    $region5: #{tpu_custom_call.1} parent=1 // loop_body
      %s23 = ssub.s32 %s18, 1
      %s24 = ssub.s32 %s18, 2
      %s25 = sadd.s32 %s18, 1
      %s26 = ssub.s32 %s18, %s25
      %p27 = scmp.eq.s32.totalorder %s26, 0
      %s29 = sadd.s32 %s28, 1
      %s30 = scalar_select %p27, %s28, %s29
      %p33 = pneg %p27
      %p34 = scmp.eq.s32.totalorder %s18, 2
      %p35 = por %p33, %p34
      %p36 = scmp.ne.s32.totalorder %s28, %s31
      %p37 = scmp.eq.s32.totalorder %s18, 0
      %p38 = por %p36, %p37
      %p39 = scmp.ne.s32.totalorder %s28, %s31
      %p40 = scmp.eq.s32.totalorder %s23, 2
      %p41 = por %p39, %p40
      %p42 = scmp.ne.s32.totalorder %s31, %s32
      %p43 = scmp.eq.s32.totalorder %s23, 0
      %p44 = por %p42, %p43
      %p45 = scmp.ne.s32.totalorder %s31, %s32
      %p46 = scmp.eq.s32.totalorder %s24, 2
      %p47 = por %p45, %p46
      %p49 = scmp.ne.s32.totalorder %s32, %s48
      %p50 = scmp.eq.s32.totalorder %s24, 0
      %p51 = por %p49, %p50
      %s52 = ssub.s32 %s18, %s25
      %p53 = scmp.eq.s32.totalorder %s52, 0
      %s55 = sadd.s32 %s54, 1
      %s56 = scalar_select %p53, %s54, %s55
      %p59 = pneg %p53
      %p60 = scmp.eq.s32.totalorder %s18, 2
      %p61 = por %p59, %p60
      %p62 = scmp.ne.s32.totalorder %s54, %s57
      %p63 = scmp.eq.s32.totalorder %s18, 0
      %p64 = por %p62, %p63
      %p65 = scmp.ne.s32.totalorder %s54, %s57
      %p66 = scmp.eq.s32.totalorder %s23, 2
      %p67 = por %p65, %p66
      %p68 = scmp.ne.s32.totalorder %s57, %s58
      %p69 = scmp.eq.s32.totalorder %s23, 0
      %p70 = por %p68, %p69
      %p71 = scmp.ne.s32.totalorder %s57, %s58
      %p72 = scmp.eq.s32.totalorder %s24, 2
      %p73 = por %p71, %p72
      %p75 = scmp.ne.s32.totalorder %s58, %s74
      %p76 = scmp.eq.s32.totalorder %s24, 0
      %p77 = por %p75, %p76
      %s79 = sadd.s32 %s78, 1
      %p82 = scmp.eq.s32.totalorder %s18, 2
      %p83 = scmp.ne.s32.totalorder %s78, %s80
      %p84 = scmp.eq.s32.totalorder %s18, 0
      %p85 = por %p83, %p84
      %p86 = scmp.ne.s32.totalorder %s78, %s80
      %p87 = scmp.eq.s32.totalorder %s23, 2
      %p88 = por %p86, %p87
      %p89 = scmp.ne.s32.totalorder %s80, %s81
      %p90 = scmp.eq.s32.totalorder %s23, 0
      %p91 = por %p89, %p90
      %p92 = scmp.ne.s32.totalorder %s80, %s81
      %p93 = scmp.eq.s32.totalorder %s24, 2
      %p94 = por %p92, %p93
      %p96 = scmp.ne.s32.totalorder %s81, %s95
      %p97 = scmp.eq.s32.totalorder %s24, 0
      %p98 = por %p96, %p97
      %s100 = sadd.s32 %s99, 1
      %p103 = scmp.eq.s32.totalorder %s18, 2
      %p104 = scmp.ne.s32.totalorder %s99, %s101
      %p105 = scmp.eq.s32.totalorder %s18, 0
      %p106 = por %p104, %p105
      %p107 = scmp.ne.s32.totalorder %s99, %s101
      %p108 = scmp.eq.s32.totalorder %s23, 2
      %p109 = por %p107, %p108
      %p110 = scmp.ne.s32.totalorder %s101, %s102
      %p111 = scmp.eq.s32.totalorder %s23, 0
      %p112 = por %p110, %p111
      %p113 = scmp.ne.s32.totalorder %s101, %s102
      %p114 = scmp.eq.s32.totalorder %s24, 2
      %p115 = por %p113, %p114
      %p117 = scmp.ne.s32.totalorder %s102, %s116
      %p118 = scmp.eq.s32.totalorder %s24, 0
      %p119 = por %p117, %p118
      %s121 = sadd.s32 %s120, 1
      %p124 = scmp.eq.s32.totalorder %s18, 2
      %p125 = scmp.ne.s32.totalorder %s120, %s122
      %p126 = scmp.eq.s32.totalorder %s18, 0
      %p127 = por %p125, %p126
      %p128 = scmp.ne.s32.totalorder %s120, %s122
      %p129 = scmp.eq.s32.totalorder %s23, 2
      %p130 = por %p128, %p129
      %p131 = scmp.ne.s32.totalorder %s122, %s123
      %p132 = scmp.eq.s32.totalorder %s23, 0
      %p133 = por %p131, %p132
      %p134 = scmp.ne.s32.totalorder %s122, %s123
      %p135 = scmp.eq.s32.totalorder %s24, 2
      %p136 = por %p134, %p135
      %p138 = scmp.ne.s32.totalorder %s123, %s137
      %p139 = scmp.eq.s32.totalorder %s24, 0
      %p140 = por %p138, %p139
      %s142 = sadd.s32 %s141, 1
      %p145 = scmp.eq.s32.totalorder %s18, 2
      %p146 = scmp.ne.s32.totalorder %s141, %s143
      %p147 = scmp.eq.s32.totalorder %s18, 0
      %p148 = por %p146, %p147
      %p149 = scmp.ne.s32.totalorder %s141, %s143
      %p150 = scmp.eq.s32.totalorder %s23, 2
      %p151 = por %p149, %p150
      %p152 = scmp.ne.s32.totalorder %s143, %s144
      %p153 = scmp.eq.s32.totalorder %s23, 0
      %p154 = por %p152, %p153
      %p155 = scmp.ne.s32.totalorder %s143, %s144
      %p156 = scmp.eq.s32.totalorder %s24, 2
      %p157 = por %p155, %p156
      %p159 = scmp.ne.s32.totalorder %s144, %s158
      %p160 = scmp.eq.s32.totalorder %s24, 0
      %p161 = por %p159, %p160
      %s163 = sadd.s32 %s162, 1
      %p166 = scmp.eq.s32.totalorder %s18, 2
      %p167 = scmp.ne.s32.totalorder %s162, %s164
      %p168 = scmp.eq.s32.totalorder %s18, 0
      %p169 = por %p167, %p168
      %p170 = scmp.ne.s32.totalorder %s162, %s164
      %p171 = scmp.eq.s32.totalorder %s23, 2
      %p172 = por %p170, %p171
      %p173 = scmp.ne.s32.totalorder %s164, %s165
      %p174 = scmp.eq.s32.totalorder %s23, 0
      %p175 = por %p173, %p174
      %p176 = scmp.ne.s32.totalorder %s164, %s165
      %p177 = scmp.eq.s32.totalorder %s24, 2
      %p178 = por %p176, %p177
      %p180 = scmp.ne.s32.totalorder %s165, %s179
      %p181 = scmp.eq.s32.totalorder %s24, 0
      %p182 = por %p180, %p181
      %s184 = sadd.s32 %s183, 1
      %p187 = scmp.eq.s32.totalorder %s18, 2
      %p188 = scmp.ne.s32.totalorder %s183, %s185
      %p189 = scmp.eq.s32.totalorder %s18, 0
      %p190 = por %p188, %p189
      %p191 = scmp.ne.s32.totalorder %s183, %s185
      %p192 = scmp.eq.s32.totalorder %s23, 2
      %p193 = por %p191, %p192
      %p194 = scmp.ne.s32.totalorder %s185, %s186
      %p195 = scmp.eq.s32.totalorder %s23, 0
      %p196 = por %p194, %p195
      %p197 = scmp.ne.s32.totalorder %s185, %s186
      %p198 = scmp.eq.s32.totalorder %s24, 2
      %p199 = por %p197, %p198
      %p201 = scmp.ne.s32.totalorder %s186, %s200
      %p202 = scmp.eq.s32.totalorder %s24, 0
      %p203 = por %p201, %p202
      %s204 = ssub.s32 %s18, %s25
      %p205 = scmp.eq.s32.totalorder %s204, 0
      %s207 = sadd.s32 %s206, 1
      %s208 = scalar_select %p205, %s206, %s207
      %p211 = pneg %p205
      %p212 = scmp.eq.s32.totalorder %s18, 2
      %p213 = por %p211, %p212
      %p214 = scmp.ne.s32.totalorder %s206, %s209
      %p215 = scmp.eq.s32.totalorder %s18, 0
      %p216 = por %p214, %p215
      %p217 = scmp.ne.s32.totalorder %s206, %s209
      %p218 = scmp.eq.s32.totalorder %s23, 2
      %p219 = por %p217, %p218
      %p220 = scmp.ne.s32.totalorder %s209, %s210
      %p221 = scmp.eq.s32.totalorder %s23, 0
      %p222 = por %p220, %p221
      %p223 = scmp.ne.s32.totalorder %s209, %s210
      %p224 = scmp.eq.s32.totalorder %s24, 2
      %p225 = por %p223, %p224
      %p227 = scmp.ne.s32.totalorder %s210, %s226
      %p228 = scmp.eq.s32.totalorder %s24, 0
      %p229 = por %p227, %p228
      %p230 = scmp.le.s32.totalorder 1, %s18
      %p231 = scmp.lt.s32.totalorder %s18, 4
      %p232 = pnand %p230, %p231
      %p233 = pneg %p232
      // Predicated region
      $region9: #{tpu_custom_call.1} parent=5 // pred_check
        _
      $region10: #{tpu_custom_call.1} parent=5 // pred_check_branch
        %235 = sbr.rel (%p232) target = $region12
      $region11: #{tpu_custom_call.1} parent=5 // pred_region
        %s236 = ssub.s32 %s18, 1
        // Predicated region
        $region13: #{tpu_custom_call.1} parent=11 // pred_check
          %p237 = pneg %p91
        $region14: #{tpu_custom_call.1} parent=11 // pred_check_branch
          %239 = sbr.rel (%p237) target = $region16
        $region15: #{tpu_custom_call.1} parent=11 // pred_region
          _
        $region16: #{tpu_custom_call.1} parent=11 // pred_fallthru
          _
        // Predicated region
        $region17: #{tpu_custom_call.1} parent=11 // pred_check
          %p240 = pneg %p112
        $region18: #{tpu_custom_call.1} parent=11 // pred_check_branch
          %242 = sbr.rel (%p240) target = $region20
        $region19: #{tpu_custom_call.1} parent=11 // pred_region
          _
        $region20: #{tpu_custom_call.1} parent=11 // pred_fallthru
          _
        // Predicated region
        $region21: #{tpu_custom_call.1} parent=11 // pred_check
          %p243 = pneg %p133
        $region22: #{tpu_custom_call.1} parent=11 // pred_check_branch
          %245 = sbr.rel (%p243) target = $region24
        $region23: #{tpu_custom_call.1} parent=11 // pred_region
          _
        $region24: #{tpu_custom_call.1} parent=11 // pred_fallthru
          _
        // Predicated region
        $region25: #{tpu_custom_call.1} parent=11 // pred_check
          %p246 = pneg %p154
        $region26: #{tpu_custom_call.1} parent=11 // pred_check_branch
          %248 = sbr.rel (%p246) target = $region28
        $region27: #{tpu_custom_call.1} parent=11 // pred_region
          %s250 = ssub.s32 256, 256
          %251 = vsyncadd [#allocation3], %s250
          %s252 = sshll.u32 [#allocation2], 4
          %s253 = int_to_ptr.vmem [resolvable:$true] %s252
          %258 = dma.hbm_to_vmem [thread:$0]  %s5, 256, %s253, [#allocation3], 128, 128, 8
        $region28: #{tpu_custom_call.1} parent=11 // pred_fallthru
          _
        // Predicated region
        $region29: #{tpu_custom_call.1} parent=11 // pred_check
          %p259 = pneg %p175
        $region30: #{tpu_custom_call.1} parent=11 // pred_check_branch
          %261 = sbr.rel (%p259) target = $region32
        $region31: #{tpu_custom_call.1} parent=11 // pred_region
          _
        $region32: #{tpu_custom_call.1} parent=11 // pred_fallthru
          _
        // Predicated region
        $region33: #{tpu_custom_call.1} parent=11 // pred_check
          %p262 = pneg %p196
        $region34: #{tpu_custom_call.1} parent=11 // pred_check_branch
          %264 = sbr.rel (%p262) target = $region36
        $region35: #{tpu_custom_call.1} parent=11 // pred_region
          _
        $region36: #{tpu_custom_call.1} parent=11 // pred_fallthru
          _
      $region12: #{tpu_custom_call.1} parent=5 // pred_fallthru
        _
      %p265 = scmp.lt.s32.totalorder %s18, 3
      // Predicated region
      $region37: #{tpu_custom_call.1} parent=5 // pred_check
        %p266 = pneg %p265
      $region38: #{tpu_custom_call.1} parent=5 // pred_check_branch
        %268 = sbr.rel (%p266) target = $region40
      $region39: #{tpu_custom_call.1} parent=5 // pred_region
        // Predicated region
        $region41: #{tpu_custom_call.1} parent=39 // pred_check
          %p269 = pneg %p38
        $region42: #{tpu_custom_call.1} parent=39 // pred_check_branch
          %271 = sbr.rel (%p269) target = $region44
        $region43: #{tpu_custom_call.1} parent=39 // pred_region
          %p272 = scmp.lt.s32.totalorder %s18, 2
          %s273 = scalar_select %p272, %s18, 2
          %s274 = smul.addr %s273, 8
          %s275 = scalar_lea.vmem %s0, %s274
        $region44: #{tpu_custom_call.1} parent=39 // pred_fallthru
          _
        // Predicated region
        $region45: #{tpu_custom_call.1} parent=39 // pred_check
          %p276 = pneg %p64
        $region46: #{tpu_custom_call.1} parent=39 // pred_check_branch
          %278 = sbr.rel (%p276) target = $region48
        $region47: #{tpu_custom_call.1} parent=39 // pred_region
          %p279 = scmp.lt.s32.totalorder %s18, 2
          %s280 = scalar_select %p279, %s18, 2
          %s281 = smul.addr %s280, 8
          %s282 = scalar_lea.vmem %s1, %s281
        $region48: #{tpu_custom_call.1} parent=39 // pred_fallthru
          _
      $region40: #{tpu_custom_call.1} parent=5 // pred_fallthru
        _
      %p283 = scmp.le.s32.totalorder 1, %s18
      %p284 = scmp.lt.s32.totalorder %s18, 4
      %p285 = pnand %p283, %p284
      %p286 = pneg %p285
      // Predicated region
      $region49: #{tpu_custom_call.1} parent=5 // pred_check
        _
      $region50: #{tpu_custom_call.1} parent=5 // pred_check_branch
        %288 = sbr.rel (%p285) target = $region52
      $region51: #{tpu_custom_call.1} parent=5 // pred_region
        %s289 = ssub.s32 %s18, 1
        // Predicated region
        $region53: #{tpu_custom_call.1} parent=51 // pred_check
          %p290 = pneg %p154
        $region54: #{tpu_custom_call.1} parent=51 // pred_check_branch
          %292 = sbr.rel (%p290) target = $region56
        $region55: #{tpu_custom_call.1} parent=51 // pred_region
          %293 = dma.done [#allocation3], 256
        $region56: #{tpu_custom_call.1} parent=51 // pred_fallthru
          _
        %p294 = scmp.lt.s32.totalorder %s23, 2
        %s295 = scalar_select %p294, %s23, 2
        %s296 = smul.addr %s295, 8
        %s297 = scalar_lea.vmem %s0, %s296
        %p298 = pneg %p44
        %p299 = pneg %p41
        %p300 = scmp.lt.s32.totalorder %s23, 2
        %s301 = scalar_select %p300, %s23, 2
        %s302 = smul.addr %s301, 8
        %s303 = scalar_lea.vmem %s1, %s302
        %p304 = pneg %p70
        %p305 = pneg %p67
        %p306 = pneg %p91
        %p307 = pneg %p88
        %p308 = pneg %p112
        %p309 = pneg %p109
        %p310 = pneg %p133
        %p311 = pneg %p130
        %p312 = pneg %p154
        %p313 = pneg %p151
        %p314 = pneg %p175
        %p315 = pneg %p172
        %p316 = pneg %p196
        %p317 = pneg %p193
        %p318 = pneg %p222
        %p319 = pneg %p219
        %s320 = sand.u32 %s209, 1
        %s321 = scalar_lea.sflag [#allocation4], %s320
        %s322 = sand.u32 %s209, 1
        %s323 = smul.addr %s322, 8
        %s324 = scalar_lea.vmem [#allocation5], %s323
        %p325 = scmp.lt.s32.totalorder %s23, 2
        %s326 = scalar_select %p325, %s23, 2
        %s327 = smul.addr %s326, 8
        %s328 = scalar_lea.vmem %s0, %s327
        %p329 = scmp.lt.s32.totalorder %s23, 2
        %s330 = scalar_select %p329, %s23, 2
        %s331 = smul.addr %s330, 8
        %s332 = scalar_lea.vmem %s1, %s331
        %v333 = vld [vmem:[%s2] sm:$0x1]
        %v334 = vld [vmem:[%s3] sm:$0x1]
        %v335 = vld [vmem:[%s6] sm:$0x1]
        %v336 = vld [vmem:[%s7] sm:$0x1]
        %v337 = vld [vmem:[%s328] sm:$0xff]
        %vm338 = vcmask 261120
        %v339 = vsel %vm338, %v337, 0.0
        %340 = vadd.xlane.f32.xlu0 %v339
        %v341 = vpop.xlane.xlu0 %340
        %v342 = vmul.f32 %v341, 0.03125
        %v343 = vsub.f32 %v337, %v342
        %v344 = vmul.f32 %v343, %v343
        %v345 = vsel %vm338, %v344, 0.0
        %346 = vadd.xlane.f32.xlu0 %v345
        %v347 = vpop.xlane.xlu0 %346
        %v348 = vmul.f32 %v347, 0.03125
        %v349 = vadd.f32 %v348, 1e-05
        %v350 = vrsqrt.pop %v349
        %v351 = vmul.f32 %v343, %v350
        %v353 = vlaneseq
        %v354 = vshrl.u32 %v353, 7
        %v355 = vsub.s32 0, %v354
        %v356 = vrot.slane %v333, %v355
        %v358 = vmul.f32 %v351, %v356
        %v360 = vlaneseq
        %v361 = vshrl.u32 %v360, 7
        %v362 = vsub.s32 0, %v361
        %v363 = vrot.slane %v334, %v362
        %v365 = vadd.f32 %v358, %v363
        %v366 = vld [vmem:[%s332] sm:$0xff]
        %v367 = vld [vmem:[%s4] sm:$0xff]
        %v368 = vld [vmem:[%s4 + $0x8] sm:$0xff]
        %v370 = vlaneseq
        %v371 = vshrl.u32 %v370, 7
        %v372 = vsub.s32 0, %v371
        %v373 = vrot.slane %v335, %v372
        %vm375 = vcmask 130048
        %v377 = vsel %vm375, %v366, 0
        %379 = vmatprep.subr.mxu0 0.0
        %380 = vmatpush1.msra.mxu0 0.0
        %381 = vmatprep.subr.mxu0 0.0
        %382 = vmatpush1.msra.mxu0 0.0
        %383 = vmatprep.subr.mxu0 0.0
        %384 = vmatpush1.msra.mxu0 0.0
        %385 = vmatprep.subr.mxu0 0.0
        %386 = vmatpush1.msra.mxu0 0.0
        %387 = vmatprep.subr.mxu0 0.0
        %388 = vmatpush1.msra.mxu0 0.0
        %389 = vmatprep.subr.mxu0 0.0
        %390 = vmatpush1.msra.mxu0 0.0
        %391 = vmatprep.subr.mxu0 0.0
        %392 = vmatpush1.msra.mxu0 0.0
        %393 = vmatprep.subr.mxu0 0.0
        %394 = vmatpush1.msra.mxu0 0.0
        %395 = vmatprep.subr.mxu0 0.0
        %396 = vmatpush1.msra.mxu0 0.0
        %397 = vmatprep.subr.mxu0 0.0
        %398 = vmatpush1.msra.mxu0 0.0
        %399 = vmatprep.subr.mxu0 0.0
        %400 = vmatpush1.msra.mxu0 0.0
        %401 = vmatprep.subr.mxu0 0.0
        %402 = vmatpush1.msra.mxu0 0.0
        %403 = vmatprep.subr.mxu0 0.0
        %404 = vmatpush1.msra.mxu0 0.0
        %405 = vmatprep.subr.mxu0 0.0
        %406 = vmatpush1.msra.mxu0 0.0
        %407 = vmatprep.subr.mxu0 0.0
        %408 = vmatpush1.msra.mxu0 %v368
        %409 = vmatprep.subr.mxu0 0.0
        %410 = vmatpush1.msra.mxu0 %v367
        %411 = vmatprep.subr.mxu0 0.0
        %412 = vmatpush2.msra.mxu0 0.0
        %413 = vmatprep.subr.mxu0 0.0
        %414 = vmatpush2.msra.mxu0 0.0
        %415 = vmatprep.subr.mxu0 0.0
        %416 = vmatpush2.msra.mxu0 0.0
        %417 = vmatprep.subr.mxu0 0.0
        %418 = vmatpush2.msra.mxu0 0.0
        %419 = vmatprep.subr.mxu0 0.0
        %420 = vmatpush2.msra.mxu0 0.0
        %421 = vmatprep.subr.mxu0 0.0
        %422 = vmatpush2.msra.mxu0 0.0
        %423 = vmatprep.subr.mxu0 0.0
        %424 = vmatpush2.msra.mxu0 0.0
        %425 = vmatprep.subr.mxu0 0.0
        %426 = vmatpush2.msra.mxu0 0.0
        %427 = vmatprep.subr.mxu0 0.0
        %428 = vmatpush2.msra.mxu0 0.0
        %429 = vmatprep.subr.mxu0 0.0
        %430 = vmatpush2.msra.mxu0 0.0
        %431 = vmatprep.subr.mxu0 0.0
        %432 = vmatpush2.msra.mxu0 0.0
        %433 = vmatprep.subr.mxu0 0.0
        %434 = vmatpush2.msra.mxu0 0.0
        %435 = vmatprep.subr.mxu0 0.0
        %436 = vmatpush2.msra.mxu0 0.0
        %437 = vmatprep.subr.mxu0 0.0
        %438 = vmatpush2.msra.mxu0 0.0
        %439 = vmatprep.subr.mxu0 0.0
        %440 = vmatpush2.msra.mxu0 0.0
        %441 = vmatprep.subr.mxu0 0.0
        %442 = vmatpush2.msra.mxu0 0.0
        %443 = vmatprep.mubr.f32.mxu0 0.0
        %444 = vmatmul.mubr.f32.gmra.mxu0 %v377
        %v445 = vpop.f32.mrf.mxu0
        %v446 = vadd.f32 %v373, %v445
        %v447 = vpop.f32.mrf.mxu0
        %448 = vdwg.mxu0
        %v449 = vld [vmem:[#allocation2] sm:$0xff]
        %v450 = vld [vmem:[#allocation2 + $0x8] sm:$0xff]
        %v452 = vlaneseq
        %v453 = vshrl.u32 %v452, 7
        %v454 = vsub.s32 0, %v453
        %v455 = vrot.slane %v336, %v454
        %457 = vmatprep.subr.mxu0 0.0
        %458 = vmatpush1.msra.mxu0 0.0
        %459 = vmatprep.subr.mxu0 0.0
        %460 = vmatpush1.msra.mxu0 0.0
        %461 = vmatprep.subr.mxu0 0.0
        %462 = vmatpush1.msra.mxu0 0.0
        %463 = vmatprep.subr.mxu0 0.0
        %464 = vmatpush1.msra.mxu0 0.0
        %465 = vmatprep.subr.mxu0 0.0
        %466 = vmatpush1.msra.mxu0 0.0
        %467 = vmatprep.subr.mxu0 0.0
        %468 = vmatpush1.msra.mxu0 0.0
        %469 = vmatprep.subr.mxu0 0.0
        %470 = vmatpush1.msra.mxu0 0.0
        %471 = vmatprep.subr.mxu0 0.0
        %472 = vmatpush1.msra.mxu0 0.0
        %473 = vmatprep.subr.mxu0 0.0
        %474 = vmatpush1.msra.mxu0 0.0
        %475 = vmatprep.subr.mxu0 0.0
        %476 = vmatpush1.msra.mxu0 0.0
        %477 = vmatprep.subr.mxu0 0.0
        %478 = vmatpush1.msra.mxu0 0.0
        %479 = vmatprep.subr.mxu0 0.0
        %480 = vmatpush1.msra.mxu0 0.0
        %481 = vmatprep.subr.mxu0 0.0
        %482 = vmatpush1.msra.mxu0 0.0
        %483 = vmatprep.subr.mxu0 0.0
        %484 = vmatpush1.msra.mxu0 0.0
        %485 = vmatprep.subr.mxu0 0.0
        %486 = vmatpush1.msra.mxu0 %v450
        %487 = vmatprep.subr.mxu0 0.0
        %488 = vmatpush1.msra.mxu0 %v449
        %489 = vmatprep.subr.mxu0 0.0
        %490 = vmatpush2.msra.mxu0 0.0
        %491 = vmatprep.subr.mxu0 0.0
        %492 = vmatpush2.msra.mxu0 0.0
        %493 = vmatprep.subr.mxu0 0.0
        %494 = vmatpush2.msra.mxu0 0.0
        %495 = vmatprep.subr.mxu0 0.0
        %496 = vmatpush2.msra.mxu0 0.0
        %497 = vmatprep.subr.mxu0 0.0
        %498 = vmatpush2.msra.mxu0 0.0
        %499 = vmatprep.subr.mxu0 0.0
        %500 = vmatpush2.msra.mxu0 0.0
        %501 = vmatprep.subr.mxu0 0.0
        %502 = vmatpush2.msra.mxu0 0.0
        %503 = vmatprep.subr.mxu0 0.0
        %504 = vmatpush2.msra.mxu0 0.0
        %505 = vmatprep.subr.mxu0 0.0
        %506 = vmatpush2.msra.mxu0 0.0
        %507 = vmatprep.subr.mxu0 0.0
        %508 = vmatpush2.msra.mxu0 0.0
        %509 = vmatprep.subr.mxu0 0.0
        %510 = vmatpush2.msra.mxu0 0.0
        %511 = vmatprep.subr.mxu0 0.0
        %512 = vmatpush2.msra.mxu0 0.0
        %513 = vmatprep.subr.mxu0 0.0
        %514 = vmatpush2.msra.mxu0 0.0
        %515 = vmatprep.subr.mxu0 0.0
        %516 = vmatpush2.msra.mxu0 0.0
        %517 = vmatprep.subr.mxu0 0.0
        %518 = vmatpush2.msra.mxu0 0.0
        %519 = vmatprep.subr.mxu0 0.0
        %520 = vmatpush2.msra.mxu0 0.0
        %521 = vmatprep.mubr.f32.mxu0 0.0
        %522 = vmatmul.mubr.f32.gmra.mxu0 %v377
        %v523 = vpop.f32.mrf.mxu0
        %v524 = vadd.f32 %v455, %v523
        %v525 = vpop.f32.mrf.mxu0
        %526 = vdwg.mxu0
        %v527 = vmul.f32 %v365, %v446
        %v528 = vadd.f32 %v527, %v524
        %529 = vst.msk [vmem:[%s324] sm:$0xff] %vm338, %v528
        %s530 = sand.u32 %s209, 1
        %s531 = scalar_lea.sflag [#allocation4], %s530
        %s532 = sand.u32 %s209, 1
        %s533 = smul.addr %s532, 8
        %s534 = scalar_lea.vmem [#allocation5], %s533
        // Predicated region
        $region57: #{tpu_custom_call.1} parent=51 // pred_check
          %p535 = pneg %p219
        $region58: #{tpu_custom_call.1} parent=51 // pred_check_branch
          %537 = sbr.rel (%p535) target = $region60
        $region59: #{tpu_custom_call.1} parent=51 // pred_region
          %s539 = ssub.s32 128, 128
          %540 = vsyncadd %s531, %s539
          %s541 = smul.addr %s23, 128
          %s542 = scalar_lea.hbm %s8, %s541
          %s544 = sshll.u32 %s534, 4
          %s545 = int_to_ptr.vmem [resolvable:$true] %s544
          %547 = dma.vmem_to_hbm [thread:$0]  %s545, 128, %s542, %s531
        $region60: #{tpu_custom_call.1} parent=51 // pred_fallthru
          _
      $region52: #{tpu_custom_call.1} parent=5 // pred_fallthru
        _
      %p548 = scmp.le.s32.totalorder 2, %s18
      // Predicated region
      $region61: #{tpu_custom_call.1} parent=5 // pred_check
        %p549 = pneg %p548
      $region62: #{tpu_custom_call.1} parent=5 // pred_check_branch
        %551 = sbr.rel (%p549) target = $region64
      $region63: #{tpu_custom_call.1} parent=5 // pred_region
        %s552 = ssub.s32 %s18, 2
        // Predicated region
        $region65: #{tpu_custom_call.1} parent=63 // pred_check
          %p553 = pneg %p225
        $region66: #{tpu_custom_call.1} parent=63 // pred_check_branch
          %555 = sbr.rel (%p553) target = $region68
        $region67: #{tpu_custom_call.1} parent=63 // pred_region
          %s556 = sand.u32 %s210, 1
          %s557 = scalar_lea.sflag [#allocation4], %s556
          %s558 = sand.u32 %s210, 1
          %s559 = smul.addr %s558, 8
          %s560 = scalar_lea.vmem [#allocation5], %s559
          %561 = dma.done %s557, 128
        $region68: #{tpu_custom_call.1} parent=63 // pred_fallthru
          _
      $region64: #{tpu_custom_call.1} parent=5 // pred_fallthru
        _
    $region6: #{tpu_custom_call.1} parent=1 // loop_footer
      %s22 = sadd.s32 1, %s18
    $region7: #{tpu_custom_call.1} parent=1 // loop_footer_branch
      %17 = sbr.rel target = $region3
    $region8: #{tpu_custom_call.1} parent=1 // loop_exit
      _
    %562 = vsyncpa [#allocation3], 1
    %s563 = scalar_lea.sflag [#allocation3], 1
    %564 = vsyncpa %s563, 1
    %565 = vsyncpa [#allocation4], 1
    %s566 = scalar_lea.sflag [#allocation4], 1
    %567 = vsyncpa %s566, 1

// kernel: tpu_custom_call.1
$region0: #{tpu_custom_call.1}
  #allocation0 [shape = 'u32[]', space=smem, size = 0x4, offset = 0x4, fixed_abs, tag = 'smem constant byte address 0x4 - core index']
  #allocation1 [shape = 'u32[144,128]{1,0:T(1,128)}', space=vmem, size = 0x12000, scoped, tag = 'internal scratch']
  %s0 = inlined_call_operand.vmem [shape: f32[20,32], index: 0, kind: input, shape index: {}]
  %s1 = inlined_call_operand.vmem [shape: f32[20,16], index: 1, kind: input, shape index: {}]
  %s2 = inlined_call_operand.vmem [shape: f32[1,32], index: 2, kind: input, shape index: {}]
  %s3 = inlined_call_operand.vmem [shape: f32[1,32], index: 3, kind: input, shape index: {}]
  %s4 = inlined_call_operand.vmem [shape: f32[16,32], index: 4, kind: input, shape index: {}]
  %s5 = inlined_call_operand.hbm [shape: f32[16,32], index: 5, kind: input, shape index: {}]
  %s6 = inlined_call_operand.vmem [shape: f32[1,32], index: 6, kind: input, shape index: {}]
  %s7 = inlined_call_operand.vmem [shape: f32[1,32], index: 7, kind: input, shape index: {}]
  %s8 = inlined_call_operand.hbm [shape: f32[20,32], index: 8, kind: output, shape index: {}]
  %s9 = sld [smem:[#allocation0]]
  $region69: #{tpu_custom_call.1} parent=0
    _
  %s11 = ssub.s32 1, %s9
  %s12 = scalar_select 0, %s11, %s9
  $region1: #{tpu_custom_call.1} parent=0
    #allocation2 [shape = 'u8[8192]{0}', space=vmem, size = 0x2000, scoped, tag = 'input window, operand 5, single buffered']
    #allocation3 [shape = 's32[2]{0}', space=sflag, size = 0x8, scoped, tag = 'scoped memory for tpu_custom_call.1']
    #allocation4 [shape = 's32[2]{0}', space=sflag, size = 0x8, scoped, tag = 'scoped memory for tpu_custom_call.1']
    #allocation5 [shape = 'u8[8192]{0}', space=vmem, size = 0x2000, scoped, tag = 'output window, operand 0']
    %13 = vsyncpa [#allocation3], 0
    %14 = vsyncpa [#allocation4], 0
    %s15 = scalar_lea.sflag [#allocation4], 1
    %16 = vsyncpa %s15, 0
    loop: start=0, step=1, limit=5
    $region2: #{tpu_custom_call.1} parent=1 // loop_pre_header
      _
    $region3: #{tpu_custom_call.1} parent=1 // loop_header
      %s18 = sphi 0, %s22
      %p19 = scmp.ge.s32.totalorder %s18, 5
      %s28 = sphi 0, %s30
      %s31 = sphi 0, %s28
      %s32 = sphi 0, %s31
      %s48 = sphi 0, %s32
      %s54 = sphi 0, %s56
      %s57 = sphi 0, %s54
      %s58 = sphi 0, %s57
      %s74 = sphi 0, %s58
      %s78 = sphi 0, %s78
      %s80 = sphi 0, %s78
      %s81 = sphi 0, %s80
      %s95 = sphi 0, %s81
      %s99 = sphi 0, %s99
      %s101 = sphi 0, %s99
      %s102 = sphi 0, %s101
      %s116 = sphi 0, %s102
      %s120 = sphi 0, %s120
      %s122 = sphi 0, %s120
      %s123 = sphi 0, %s122
      %s137 = sphi 0, %s123
      %s141 = sphi 0, %s141
      %s143 = sphi 0, %s141
      %s144 = sphi 0, %s143
      %s158 = sphi 0, %s144
      %s162 = sphi 0, %s162
      %s164 = sphi 0, %s162
      %s165 = sphi 0, %s164
      %s179 = sphi 0, %s165
      %s183 = sphi 0, %s183
      %s185 = sphi 0, %s183
      %s186 = sphi 0, %s185
      %s200 = sphi 0, %s186
      %s206 = sphi 0, %s208
      %s209 = sphi 0, %s206
      %s210 = sphi 0, %s209
      %s226 = sphi 0, %s210
    $region4: #{tpu_custom_call.1} parent=1 // loop_header_branch
      %21 = sbr.rel (%p19) target = $region8
    $region5: #{tpu_custom_call.1} parent=1 // loop_body
      %s23 = ssub.s32 %s18, 1
      %s24 = ssub.s32 %s18, 2
      %s25 = sadd.s32 %s18, 1
      %s26 = ssub.s32 %s18, %s25
      %p27 = scmp.eq.s32.totalorder %s26, 0
      %s29 = sadd.s32 %s28, 1
      %s30 = scalar_select %p27, %s28, %s29
      %p33 = pneg %p27
      %p34 = scmp.eq.s32.totalorder %s18, 2
      %p35 = por %p33, %p34
      %p36 = scmp.ne.s32.totalorder %s28, %s31
      %p37 = scmp.eq.s32.totalorder %s18, 0
      %p38 = por %p36, %p37
      %p39 = scmp.ne.s32.totalorder %s28, %s31
      %p40 = scmp.eq.s32.totalorder %s23, 2
      %p41 = por %p39, %p40
      %p42 = scmp.ne.s32.totalorder %s31, %s32
      %p43 = scmp.eq.s32.totalorder %s23, 0
      %p44 = por %p42, %p43
      %p45 = scmp.ne.s32.totalorder %s31, %s32
      %p46 = scmp.eq.s32.totalorder %s24, 2
      %p47 = por %p45, %p46
      %p49 = scmp.ne.s32.totalorder %s32, %s48
      %p50 = scmp.eq.s32.totalorder %s24, 0
      %p51 = por %p49, %p50
      %s52 = ssub.s32 %s18, %s25
      %p53 = scmp.eq.s32.totalorder %s52, 0
      %s55 = sadd.s32 %s54, 1
      %s56 = scalar_select %p53, %s54, %s55
      %p59 = pneg %p53
      %p60 = scmp.eq.s32.totalorder %s18, 2
      %p61 = por %p59, %p60
      %p62 = scmp.ne.s32.totalorder %s54, %s57
      %p63 = scmp.eq.s32.totalorder %s18, 0
      %p64 = por %p62, %p63
      %p65 = scmp.ne.s32.totalorder %s54, %s57
      %p66 = scmp.eq.s32.totalorder %s23, 2
      %p67 = por %p65, %p66
      %p68 = scmp.ne.s32.totalorder %s57, %s58
      %p69 = scmp.eq.s32.totalorder %s23, 0
      %p70 = por %p68, %p69
      %p71 = scmp.ne.s32.totalorder %s57, %s58
      %p72 = scmp.eq.s32.totalorder %s24, 2
      %p73 = por %p71, %p72
      %p75 = scmp.ne.s32.totalorder %s58, %s74
      %p76 = scmp.eq.s32.totalorder %s24, 0
      %p77 = por %p75, %p76
      %s79 = sadd.s32 %s78, 1
      %p82 = scmp.eq.s32.totalorder %s18, 2
      %p83 = scmp.ne.s32.totalorder %s78, %s80
      %p84 = scmp.eq.s32.totalorder %s18, 0
      %p85 = por %p83, %p84
      %p86 = scmp.ne.s32.totalorder %s78, %s80
      %p87 = scmp.eq.s32.totalorder %s23, 2
      %p88 = por %p86, %p87
      %p89 = scmp.ne.s32.totalorder %s80, %s81
      %p90 = scmp.eq.s32.totalorder %s23, 0
      %p91 = por %p89, %p90
      %p92 = scmp.ne.s32.totalorder %s80, %s81
      %p93 = scmp.eq.s32.totalorder %s24, 2
      %p94 = por %p92, %p93
      %p96 = scmp.ne.s32.totalorder %s81, %s95
      %p97 = scmp.eq.s32.totalorder %s24, 0
      %p98 = por %p96, %p97
      %s100 = sadd.s32 %s99, 1
      %p103 = scmp.eq.s32.totalorder %s18, 2
      %p104 = scmp.ne.s32.totalorder %s99, %s101
      %p105 = scmp.eq.s32.totalorder %s18, 0
      %p106 = por %p104, %p105
      %p107 = scmp.ne.s32.totalorder %s99, %s101
      %p108 = scmp.eq.s32.totalorder %s23, 2
      %p109 = por %p107, %p108
      %p110 = scmp.ne.s32.totalorder %s101, %s102
      %p111 = scmp.eq.s32.totalorder %s23, 0
      %p112 = por %p110, %p111
      %p113 = scmp.ne.s32.totalorder %s101, %s102
      %p114 = scmp.eq.s32.totalorder %s24, 2
      %p115 = por %p113, %p114
      %p117 = scmp.ne.s32.totalorder %s102, %s116
      %p118 = scmp.eq.s32.totalorder %s24, 0
      %p119 = por %p117, %p118
      %s121 = sadd.s32 %s120, 1
      %p124 = scmp.eq.s32.totalorder %s18, 2
      %p125 = scmp.ne.s32.totalorder %s120, %s122
      %p126 = scmp.eq.s32.totalorder %s18, 0
      %p127 = por %p125, %p126
      %p128 = scmp.ne.s32.totalorder %s120, %s122
      %p129 = scmp.eq.s32.totalorder %s23, 2
      %p130 = por %p128, %p129
      %p131 = scmp.ne.s32.totalorder %s122, %s123
      %p132 = scmp.eq.s32.totalorder %s23, 0
      %p133 = por %p131, %p132
      %p134 = scmp.ne.s32.totalorder %s122, %s123
      %p135 = scmp.eq.s32.totalorder %s24, 2
      %p136 = por %p134, %p135
      %p138 = scmp.ne.s32.totalorder %s123, %s137
      %p139 = scmp.eq.s32.totalorder %s24, 0
      %p140 = por %p138, %p139
      %s142 = sadd.s32 %s141, 1
      %p145 = scmp.eq.s32.totalorder %s18, 2
      %p146 = scmp.ne.s32.totalorder %s141, %s143
      %p147 = scmp.eq.s32.totalorder %s18, 0
      %p148 = por %p146, %p147
      %p149 = scmp.ne.s32.totalorder %s141, %s143
      %p150 = scmp.eq.s32.totalorder %s23, 2
      %p151 = por %p149, %p150
      %p152 = scmp.ne.s32.totalorder %s143, %s144
      %p153 = scmp.eq.s32.totalorder %s23, 0
      %p154 = por %p152, %p153
      %p155 = scmp.ne.s32.totalorder %s143, %s144
      %p156 = scmp.eq.s32.totalorder %s24, 2
      %p157 = por %p155, %p156
      %p159 = scmp.ne.s32.totalorder %s144, %s158
      %p160 = scmp.eq.s32.totalorder %s24, 0
      %p161 = por %p159, %p160
      %s163 = sadd.s32 %s162, 1
      %p166 = scmp.eq.s32.totalorder %s18, 2
      %p167 = scmp.ne.s32.totalorder %s162, %s164
      %p168 = scmp.eq.s32.totalorder %s18, 0
      %p169 = por %p167, %p168
      %p170 = scmp.ne.s32.totalorder %s162, %s164
      %p171 = scmp.eq.s32.totalorder %s23, 2
      %p172 = por %p170, %p171
      %p173 = scmp.ne.s32.totalorder %s164, %s165
      %p174 = scmp.eq.s32.totalorder %s23, 0
      %p175 = por %p173, %p174
      %p176 = scmp.ne.s32.totalorder %s164, %s165
      %p177 = scmp.eq.s32.totalorder %s24, 2
      %p178 = por %p176, %p177
      %p180 = scmp.ne.s32.totalorder %s165, %s179
      %p181 = scmp.eq.s32.totalorder %s24, 0
      %p182 = por %p180, %p181
      %s184 = sadd.s32 %s183, 1
      %p187 = scmp.eq.s32.totalorder %s18, 2
      %p188 = scmp.ne.s32.totalorder %s183, %s185
      %p189 = scmp.eq.s32.totalorder %s18, 0
      %p190 = por %p188, %p189
      %p191 = scmp.ne.s32.totalorder %s183, %s185
      %p192 = scmp.eq.s32.totalorder %s23, 2
      %p193 = por %p191, %p192
      %p194 = scmp.ne.s32.totalorder %s185, %s186
      %p195 = scmp.eq.s32.totalorder %s23, 0
      %p196 = por %p194, %p195
      %p197 = scmp.ne.s32.totalorder %s185, %s186
      %p198 = scmp.eq.s32.totalorder %s24, 2
      %p199 = por %p197, %p198
      %p201 = scmp.ne.s32.totalorder %s186, %s200
      %p202 = scmp.eq.s32.totalorder %s24, 0
      %p203 = por %p201, %p202
      %s204 = ssub.s32 %s18, %s25
      %p205 = scmp.eq.s32.totalorder %s204, 0
      %s207 = sadd.s32 %s206, 1
      %s208 = scalar_select %p205, %s206, %s207
      %p211 = pneg %p205
      %p212 = scmp.eq.s32.totalorder %s18, 2
      %p213 = por %p211, %p212
      %p214 = scmp.ne.s32.totalorder %s206, %s209
      %p215 = scmp.eq.s32.totalorder %s18, 0
      %p216 = por %p214, %p215
      %p217 = scmp.ne.s32.totalorder %s206, %s209
      %p218 = scmp.eq.s32.totalorder %s23, 2
      %p219 = por %p217, %p218
      %p220 = scmp.ne.s32.totalorder %s209, %s210
      %p221 = scmp.eq.s32.totalorder %s23, 0
      %p222 = por %p220, %p221
      %p223 = scmp.ne.s32.totalorder %s209, %s210
      %p224 = scmp.eq.s32.totalorder %s24, 2
      %p225 = por %p223, %p224
      %p227 = scmp.ne.s32.totalorder %s210, %s226
      %p228 = scmp.eq.s32.totalorder %s24, 0
      %p229 = por %p227, %p228
      %p230 = scmp.le.s32.totalorder 1, %s18
      %p231 = scmp.lt.s32.totalorder %s18, 4
      %p232 = pnand %p230, %p231
      %p233 = pneg %p232
      // Predicated region
      $region9: #{tpu_custom_call.1} parent=5 // pred_check
        _
      $region10: #{tpu_custom_call.1} parent=5 // pred_check_branch
        %235 = sbr.rel (%p232) target = $region12
      $region11: #{tpu_custom_call.1} parent=5 // pred_region
        %s236 = ssub.s32 %s18, 1
        // Predicated region
        $region13: #{tpu_custom_call.1} parent=11 // pred_check
          %p237 = pneg %p91
        $region14: #{tpu_custom_call.1} parent=11 // pred_check_branch
          %239 = sbr.rel (%p237) target = $region16
        $region15: #{tpu_custom_call.1} parent=11 // pred_region
          _
        $region16: #{tpu_custom_call.1} parent=11 // pred_fallthru
          _
        // Predicated region
        $region17: #{tpu_custom_call.1} parent=11 // pred_check
          %p240 = pneg %p112
        $region18: #{tpu_custom_call.1} parent=11 // pred_check_branch
          %242 = sbr.rel (%p240) target = $region20
        $region19: #{tpu_custom_call.1} parent=11 // pred_region
          _
        $region20: #{tpu_custom_call.1} parent=11 // pred_fallthru
          _
        // Predicated region
        $region21: #{tpu_custom_call.1} parent=11 // pred_check
          %p243 = pneg %p133
        $region22: #{tpu_custom_call.1} parent=11 // pred_check_branch
          %245 = sbr.rel (%p243) target = $region24
        $region23: #{tpu_custom_call.1} parent=11 // pred_region
          _
        $region24: #{tpu_custom_call.1} parent=11 // pred_fallthru
          _
        // Predicated region
        $region25: #{tpu_custom_call.1} parent=11 // pred_check
          %p246 = pneg %p154
        $region26: #{tpu_custom_call.1} parent=11 // pred_check_branch
          %248 = sbr.rel (%p246) target = $region28
        $region27: #{tpu_custom_call.1} parent=11 // pred_region
          %s250 = ssub.s32 256, 256
          %251 = vsyncadd [#allocation3], %s250
          %s252 = sshll.u32 [#allocation2], 4
          %s253 = int_to_ptr.vmem [resolvable:$true] %s252
          %258 = dma.hbm_to_vmem [thread:$0]  %s5, 256, %s253, [#allocation3], 128, 128, 8
        $region28: #{tpu_custom_call.1} parent=11 // pred_fallthru
          _
        // Predicated region
        $region29: #{tpu_custom_call.1} parent=11 // pred_check
          %p259 = pneg %p175
        $region30: #{tpu_custom_call.1} parent=11 // pred_check_branch
          %261 = sbr.rel (%p259) target = $region32
        $region31: #{tpu_custom_call.1} parent=11 // pred_region
          _
        $region32: #{tpu_custom_call.1} parent=11 // pred_fallthru
          _
        // Predicated region
        $region33: #{tpu_custom_call.1} parent=11 // pred_check
          %p262 = pneg %p196
        $region34: #{tpu_custom_call.1} parent=11 // pred_check_branch
          %264 = sbr.rel (%p262) target = $region36
        $region35: #{tpu_custom_call.1} parent=11 // pred_region
          _
        $region36: #{tpu_custom_call.1} parent=11 // pred_fallthru
          _
      $region12: #{tpu_custom_call.1} parent=5 // pred_fallthru
        _
      %p265 = scmp.lt.s32.totalorder %s18, 3
      // Predicated region
      $region37: #{tpu_custom_call.1} parent=5 // pred_check
        %p266 = pneg %p265
      $region38: #{tpu_custom_call.1} parent=5 // pred_check_branch
        %268 = sbr.rel (%p266) target = $region40
      $region39: #{tpu_custom_call.1} parent=5 // pred_region
        // Predicated region
        $region41: #{tpu_custom_call.1} parent=39 // pred_check
          %p269 = pneg %p38
        $region42: #{tpu_custom_call.1} parent=39 // pred_check_branch
          %271 = sbr.rel (%p269) target = $region44
        $region43: #{tpu_custom_call.1} parent=39 // pred_region
          %p272 = scmp.lt.s32.totalorder %s18, 2
          %s273 = scalar_select %p272, %s18, 2
          %s274 = smul.addr %s273, 8
          %s275 = scalar_lea.vmem %s0, %s274
        $region44: #{tpu_custom_call.1} parent=39 // pred_fallthru
          _
        // Predicated region
        $region45: #{tpu_custom_call.1} parent=39 // pred_check
          %p276 = pneg %p64
        $region46: #{tpu_custom_call.1} parent=39 // pred_check_branch
          %278 = sbr.rel (%p276) target = $region48
        $region47: #{tpu_custom_call.1} parent=39 // pred_region
          %p279 = scmp.lt.s32.totalorder %s18, 2
          %s280 = scalar_select %p279, %s18, 2
          %s281 = smul.addr %s280, 8
          %s282 = scalar_lea.vmem %s1, %s281
        $region48: #{tpu_custom_call.1} parent=39 // pred_fallthru
          _
      $region40: #{tpu_custom_call.1} parent=5 // pred_fallthru
        _
      %p283 = scmp.le.s32.totalorder 1, %s18
      %p284 = scmp.lt.s32.totalorder %s18, 4
      %p285 = pnand %p283, %p284
      %p286 = pneg %p285
      // Predicated region
      $region49: #{tpu_custom_call.1} parent=5 // pred_check
        _
      $region50: #{tpu_custom_call.1} parent=5 // pred_check_branch
        %288 = sbr.rel (%p285) target = $region52
      $region51: #{tpu_custom_call.1} parent=5 // pred_region
        %s289 = ssub.s32 %s18, 1
        // Predicated region
        $region53: #{tpu_custom_call.1} parent=51 // pred_check
          %p290 = pneg %p154
        $region54: #{tpu_custom_call.1} parent=51 // pred_check_branch
          %292 = sbr.rel (%p290) target = $region56
        $region55: #{tpu_custom_call.1} parent=51 // pred_region
          %293 = dma.done [#allocation3], 256
        $region56: #{tpu_custom_call.1} parent=51 // pred_fallthru
          _
        %p294 = scmp.lt.s32.totalorder %s23, 2
        %s295 = scalar_select %p294, %s23, 2
        %s296 = smul.addr %s295, 8
        %s297 = scalar_lea.vmem %s0, %s296
        %p298 = pneg %p44
        %p299 = pneg %p41
        %p300 = scmp.lt.s32.totalorder %s23, 2
        %s301 = scalar_select %p300, %s23, 2
        %s302 = smul.addr %s301, 8
        %s303 = scalar_lea.vmem %s1, %s302
        %p304 = pneg %p70
        %p305 = pneg %p67
        %p306 = pneg %p91
        %p307 = pneg %p88
        %p308 = pneg %p112
        %p309 = pneg %p109
        %p310 = pneg %p133
        %p311 = pneg %p130
        %p312 = pneg %p154
        %p313 = pneg %p151
        %p314 = pneg %p175
        %p315 = pneg %p172
        %p316 = pneg %p196
        %p317 = pneg %p193
        %p318 = pneg %p222
        %p319 = pneg %p219
        %s320 = sand.u32 %s209, 1
        %s321 = scalar_lea.sflag [#allocation4], %s320
        %s322 = sand.u32 %s209, 1
        %s323 = smul.addr %s322, 8
        %s324 = scalar_lea.vmem [#allocation5], %s323
        %p325 = scmp.lt.s32.totalorder %s23, 2
        %s326 = scalar_select %p325, %s23, 2
        %s327 = smul.addr %s326, 8
        %s328 = scalar_lea.vmem %s0, %s327
        %p329 = scmp.lt.s32.totalorder %s23, 2
        %s330 = scalar_select %p329, %s23, 2
        %s331 = smul.addr %s330, 8
        %s332 = scalar_lea.vmem %s1, %s331
        %v333 = vld [vmem:[%s2] sm:$0x1]
        %v334 = vld [vmem:[%s3] sm:$0x1]
        %v335 = vld [vmem:[%s6] sm:$0x1]
        %v336 = vld [vmem:[%s7] sm:$0x1]
        %v337 = vld [vmem:[%s328] sm:$0xff]
        %vm338 = vcmask 261120
        %v339 = vsel %vm338, %v337, 0.0
        %340 = vadd.xlane.f32.xlu0 %v339
        %v341 = vpop.xlane.xlu0 %340
        %v342 = vmul.f32 %v341, 0.03125
        %v343 = vsub.f32 %v337, %v342
        %v344 = vmul.f32 %v343, %v343
        %v345 = vsel %vm338, %v344, 0.0
        %346 = vadd.xlane.f32.xlu0 %v345
        %v347 = vpop.xlane.xlu0 %346
        %v348 = vmul.f32 %v347, 0.03125
        %v349 = vadd.f32 %v348, 1e-05
        %v350 = vrsqrt.pop %v349
        %v351 = vmul.f32 %v343, %v350
        %v353 = vlaneseq
        %v354 = vshrl.u32 %v353, 7
        %v355 = vsub.s32 0, %v354
        %v356 = vrot.slane %v333, %v355
        %v358 = vmul.f32 %v351, %v356
        %v360 = vlaneseq
        %v361 = vshrl.u32 %v360, 7
        %v362 = vsub.s32 0, %v361
        %v363 = vrot.slane %v334, %v362
        %v365 = vadd.f32 %v358, %v363
        %v366 = vld [vmem:[%s332] sm:$0xff]
        %v367 = vld [vmem:[%s4] sm:$0xff]
        %v368 = vld [vmem:[%s4 + $0x8] sm:$0xff]
        %v370 = vlaneseq
        %v371 = vshrl.u32 %v370, 7
        %v372 = vsub.s32 0, %v371
        %v373 = vrot.slane %v335, %v372
        %vm375 = vcmask 130048
        %v377 = vsel %vm375, %v366, 0
        %379 = vmatprep.subr.mxu0 0.0
        %380 = vmatpush1.msra.mxu0 0.0
        %381 = vmatprep.subr.mxu0 0.0
        %382 = vmatpush1.msra.mxu0 0.0
        %383 = vmatprep.subr.mxu0 0.0
        %384 = vmatpush1.msra.mxu0 0.0
        %385 = vmatprep.subr.mxu0 0.0
        %386 = vmatpush1.msra.mxu0 0.0
        %387 = vmatprep.subr.mxu0 0.0
        %388 = vmatpush1.msra.mxu0 0.0
        %389 = vmatprep.subr.mxu0 0.0
        %390 = vmatpush1.msra.mxu0 0.0
        %391 = vmatprep.subr.mxu0 0.0
        %392 = vmatpush1.msra.mxu0 0.0
        %393 = vmatprep.subr.mxu0 0.0
        %394 = vmatpush1.msra.mxu0 0.0
        %395 = vmatprep.subr.mxu0 0.0
        %396 = vmatpush1.msra.mxu0 0.0
        %397 = vmatprep.subr.mxu0 0.0
        %398 = vmatpush1.msra.mxu0 0.0
        %399 = vmatprep.subr.mxu0 0.0
        %400 = vmatpush1.msra.mxu0 0.0
        %401 = vmatprep.subr.mxu0 0.0
        %402 = vmatpush1.msra.mxu0 0.0
        %403 = vmatprep.subr.mxu0 0.0
        %404 = vmatpush1.msra.mxu0 0.0
        %405 = vmatprep.subr.mxu0 0.0
        %406 = vmatpush1.msra.mxu0 0.0
        %407 = vmatprep.subr.mxu0 0.0
        %408 = vmatpush1.msra.mxu0 %v368
        %409 = vmatprep.subr.mxu0 0.0
        %410 = vmatpush1.msra.mxu0 %v367
        %411 = vmatprep.subr.mxu0 0.0
        %412 = vmatpush2.msra.mxu0 0.0
        %413 = vmatprep.subr.mxu0 0.0
        %414 = vmatpush2.msra.mxu0 0.0
        %415 = vmatprep.subr.mxu0 0.0
        %416 = vmatpush2.msra.mxu0 0.0
        %417 = vmatprep.subr.mxu0 0.0
        %418 = vmatpush2.msra.mxu0 0.0
        %419 = vmatprep.subr.mxu0 0.0
        %420 = vmatpush2.msra.mxu0 0.0
        %421 = vmatprep.subr.mxu0 0.0
        %422 = vmatpush2.msra.mxu0 0.0
        %423 = vmatprep.subr.mxu0 0.0
        %424 = vmatpush2.msra.mxu0 0.0
        %425 = vmatprep.subr.mxu0 0.0
        %426 = vmatpush2.msra.mxu0 0.0
        %427 = vmatprep.subr.mxu0 0.0
        %428 = vmatpush2.msra.mxu0 0.0
        %429 = vmatprep.subr.mxu0 0.0
        %430 = vmatpush2.msra.mxu0 0.0
        %431 = vmatprep.subr.mxu0 0.0
        %432 = vmatpush2.msra.mxu0 0.0
        %433 = vmatprep.subr.mxu0 0.0
        %434 = vmatpush2.msra.mxu0 0.0
        %435 = vmatprep.subr.mxu0 0.0
        %436 = vmatpush2.msra.mxu0 0.0
        %437 = vmatprep.subr.mxu0 0.0
        %438 = vmatpush2.msra.mxu0 0.0
        %439 = vmatprep.subr.mxu0 0.0
        %440 = vmatpush2.msra.mxu0 0.0
        %441 = vmatprep.subr.mxu0 0.0
        %442 = vmatpush2.msra.mxu0 0.0
        %443 = vmatprep.mubr.f32.mxu0 0.0
        %444 = vmatmul.mubr.f32.gmra.mxu0 %v377
        %v445 = vpop.f32.mrf.mxu0
        %v446 = vadd.f32 %v373, %v445
        %v447 = vpop.f32.mrf.mxu0
        %448 = vdwg.mxu0
        %v449 = vld [vmem:[#allocation2] sm:$0xff]
        %v450 = vld [vmem:[#allocation2 + $0x8] sm:$0xff]
        %v452 = vlaneseq
        %v453 = vshrl.u32 %v452, 7
        %v454 = vsub.s32 0, %v453
        %v455 = vrot.slane %v336, %v454
        %457 = vmatprep.subr.mxu0 0.0
        %458 = vmatpush1.msra.mxu0 0.0
        %459 = vmatprep.subr.mxu0 0.0
        %460 = vmatpush1.msra.mxu0 0.0
        %461 = vmatprep.subr.mxu0 0.0
        %462 = vmatpush1.msra.mxu0 0.0
        %463 = vmatprep.subr.mxu0 0.0
        %464 = vmatpush1.msra.mxu0 0.0
        %465 = vmatprep.subr.mxu0 0.0
        %466 = vmatpush1.msra.mxu0 0.0
        %467 = vmatprep.subr.mxu0 0.0
        %468 = vmatpush1.msra.mxu0 0.0
        %469 = vmatprep.subr.mxu0 0.0
        %470 = vmatpush1.msra.mxu0 0.0
        %471 = vmatprep.subr.mxu0 0.0
        %472 = vmatpush1.msra.mxu0 0.0
        %473 = vmatprep.subr.mxu0 0.0
        %474 = vmatpush1.msra.mxu0 0.0
        %475 = vmatprep.subr.mxu0 0.0
        %476 = vmatpush1.msra.mxu0 0.0
        %477 = vmatprep.subr.mxu0 0.0
        %478 = vmatpush1.msra.mxu0 0.0
        %479 = vmatprep.subr.mxu0 0.0
        %480 = vmatpush1.msra.mxu0 0.0
        %481 = vmatprep.subr.mxu0 0.0
        %482 = vmatpush1.msra.mxu0 0.0
        %483 = vmatprep.subr.mxu0 0.0
        %484 = vmatpush1.msra.mxu0 0.0
        %485 = vmatprep.subr.mxu0 0.0
        %486 = vmatpush1.msra.mxu0 %v450
        %487 = vmatprep.subr.mxu0 0.0
        %488 = vmatpush1.msra.mxu0 %v449
        %489 = vmatprep.subr.mxu0 0.0
        %490 = vmatpush2.msra.mxu0 0.0
        %491 = vmatprep.subr.mxu0 0.0
        %492 = vmatpush2.msra.mxu0 0.0
        %493 = vmatprep.subr.mxu0 0.0
        %494 = vmatpush2.msra.mxu0 0.0
        %495 = vmatprep.subr.mxu0 0.0
        %496 = vmatpush2.msra.mxu0 0.0
        %497 = vmatprep.subr.mxu0 0.0
        %498 = vmatpush2.msra.mxu0 0.0
        %499 = vmatprep.subr.mxu0 0.0
        %500 = vmatpush2.msra.mxu0 0.0
        %501 = vmatprep.subr.mxu0 0.0
        %502 = vmatpush2.msra.mxu0 0.0
        %503 = vmatprep.subr.mxu0 0.0
        %504 = vmatpush2.msra.mxu0 0.0
        %505 = vmatprep.subr.mxu0 0.0
        %506 = vmatpush2.msra.mxu0 0.0
        %507 = vmatprep.subr.mxu0 0.0
        %508 = vmatpush2.msra.mxu0 0.0
        %509 = vmatprep.subr.mxu0 0.0
        %510 = vmatpush2.msra.mxu0 0.0
        %511 = vmatprep.subr.mxu0 0.0
        %512 = vmatpush2.msra.mxu0 0.0
        %513 = vmatprep.subr.mxu0 0.0
        %514 = vmatpush2.msra.mxu0 0.0
        %515 = vmatprep.subr.mxu0 0.0
        %516 = vmatpush2.msra.mxu0 0.0
        %517 = vmatprep.subr.mxu0 0.0
        %518 = vmatpush2.msra.mxu0 0.0
        %519 = vmatprep.subr.mxu0 0.0
        %520 = vmatpush2.msra.mxu0 0.0
        %521 = vmatprep.mubr.f32.mxu0 0.0
        %522 = vmatmul.mubr.f32.gmra.mxu0 %v377
        %v523 = vpop.f32.mrf.mxu0
        %v524 = vadd.f32 %v455, %v523
        %v525 = vpop.f32.mrf.mxu0
        %526 = vdwg.mxu0
        %v527 = vmul.f32 %v365, %v446
        %v528 = vadd.f32 %v527, %v524
        %529 = vst.msk [vmem:[%s324] sm:$0xff] %vm338, %v528
        %s530 = sand.u32 %s209, 1
        %s531 = scalar_lea.sflag [#allocation4], %s530
        %s532 = sand.u32 %s209, 1
        %s533 = smul.addr %s532, 8
        %s534 = scalar_lea.vmem [#allocation5], %s533
        // Predicated region
        $region57: #{tpu_custom_call.1} parent=51 // pred_check
          %p535 = pneg %p219
        $region58: #{tpu_custom_call.1} parent=51 // pred_check_branch
          %537 = sbr.rel (%p535) target = $region60
        $region59: #{tpu_custom_call.1} parent=51 // pred_region
          %s539 = ssub.s32 128, 128
          %540 = vsyncadd %s531, %s539
          %s541 = smul.addr %s23, 128
          %s542 = scalar_lea.hbm %s8, %s541
          %s544 = sshll.u32 %s534, 4
          %s545 = int_to_ptr.vmem [resolvable:$true] %s544
          %547 = dma.vmem_to_hbm [thread:$0]  %s545, 128, %s542, %s531
        $region60: #{tpu_custom_call.1} parent=51 // pred_fallthru
          _
      $region52: #{tpu_custom_call.1} parent=5 // pred_fallthru
        _
      %p548 = scmp.le.s32.totalorder 2, %s18
      // Predicated region
      $region61: #{tpu_custom_call.1} parent=5 // pred_check
        %p549 = pneg %p548
      $region62: #{tpu_custom_call.1} parent=5 // pred_check_branch
        %551 = sbr.rel (%p549) target = $region64
      $region63: #{tpu_custom_call.1} parent=5 // pred_region
        %s552 = ssub.s32 %s18, 2
        // Predicated region
        $region65: #{tpu_custom_call.1} parent=63 // pred_check
          %p553 = pneg %p225
        $region66: #{tpu_custom_call.1} parent=63 // pred_check_branch
          %555 = sbr.rel (%p553) target = $region68
        $region67: #{tpu_custom_call.1} parent=63 // pred_region
          %s556 = sand.u32 %s210, 1
          %s557 = scalar_lea.sflag [#allocation4], %s556
          %s558 = sand.u32 %s210, 1
          %s559 = smul.addr %s558, 8
          %s560 = scalar_lea.vmem [#allocation5], %s559
          %561 = dma.done %s557, 128
        $region68: #{tpu_custom_call.1} parent=63 // pred_fallthru
          _
      $region64: #{tpu_custom_call.1} parent=5 // pred_fallthru
        _
    $region6: #{tpu_custom_call.1} parent=1 // loop_footer
      %s22 = sadd.s32 1, %s18
    $region7: #{tpu_custom_call.1} parent=1 // loop_footer_branch
      %17 = sbr.rel target = $region3
    $region8: #{tpu_custom_call.1} parent=1 // loop_exit
      _
    %562 = vsyncpa [#allocation3], 1
    %s563 = scalar_lea.sflag [#allocation3], 1
    %564 = vsyncpa %s563, 1
    %565 = vsyncpa [#allocation4], 1
    %s566 = scalar_lea.sflag [#allocation4], 1
    %567 = vsyncpa %s566, 1

</llo_original>
